<compile_context>
chip_gen: v6e
topology: v6e:2x2x1
jax: 0.10.0
libtpu: 0.0.40
codegen_flags: <defaults>
</compile_context>

<pallas_src>
import math

import jax
import jax.numpy as jnp
import numpy as np
from jax import lax
from jax.experimental import pallas as pl
from jax.experimental.pallas import tpu as pltpu

TEMPERATURE = 1.0  # self.temperature in the PyTorch module
_LANES = 128


def _round_up(v, m):
    return ((v + m - 1) // m) * m


def _sublane(itemsize):
    # sublanes per VMEM tile row-group: f32 -> 8, bf16 -> 16, int8/fp8 -> 32
    return 32 // int(itemsize)


def _vmem_tile_bytes(shape, itemsize):
    """Layout-padded VMEM footprint of a >=2-D array/block (last dim -> lanes)."""
    lead = 1
    for d in shape[:-2]:
        lead *= int(d)
    sub = _round_up(int(shape[-2]), _sublane(itemsize))
    lane = _round_up(int(shape[-1]), _LANES)
    return lead * sub * lane * int(itemsize)


def _physical_vmem_bytes():
    """Physical VMEM capacity; conservative v7x-sized fallback works everywhere."""
    try:
        return int(pltpu.get_tpu_info().vmem_capacity_bytes)
    except Exception:
        return 64 * 1024 * 1024


def _plan_tiles(B, C, HW, itemsize, budget, weight_bytes, O):
    """Pick (b_tile, hw_tile, vmem_needed_bytes).

    1) Whole-row blocks (b_tile, C, HW): contiguous linear DMA, per-block pooled
       sum, no cross-step accumulator.  Prefer >=2 row blocks so the 'parallel'
       batch axis can be sharded over both v7x TensorCores.
    2) Only if a single batch's rows don't fit: split HW into the largest
       128-multiple tile that fits (b_tile = 1, lane-dense accumulator).
    """
    headroom = 2 << 20
    sub = _sublane(itemsize)

    def extra(b_tile, split):
        outs = 2 * (_vmem_tile_bytes((b_tile, 1, C), 4) +
                    _vmem_tile_bytes((b_tile, 1, O), 4))
        acc = b_tile * _round_up(C, 8) * _LANES * 4 if split else 0
        return weight_bytes + outs + acc + headroom

    def x_block(b_tile, hw_tile):          # double-buffered by the pipeline
        return 2 * b_tile * _round_up(C, sub) * _round_up(hw_tile, _LANES) * itemsize

    # --- 1) whole-row blocks ---
    divisors = [d for d in range(1, B + 1) if B % d == 0]
    pref = sorted([d for d in divisors if B == 1 or d <= B // 2], reverse=True)
    rest = sorted([d for d in divisors if d not in pref], reverse=True)
    for b_tile in pref + rest:
        need = extra(b_tile, split=False) + x_block(b_tile, HW)
        if need <= budget:
            return b_tile, HW, need

    # --- 2) split the spatial axis (one batch row-block at a time) ---
    other = extra(1, split=True)
    avail = max(budget - other, 0)
    max_hw = avail // (2 * _round_up(C, sub) * itemsize)
    hw_tile = (min(max_hw, HW) // _LANES) * _LANES
    if hw_tile < _LANES:
        # TODO(synk): pathological C where even a 128-lane tile overflows the budget;
        # fall back to the minimum tile and rely on the physically-capped vmem_limit.
        hw_tile = _LANES if HW >= _LANES else HW
    return 1, hw_tile, other + x_block(1, hw_tile)


def _make_kernel(HW, hw_tile, grid_hw, b_tile, C):
    inv_t = 1.0 / TEMPERATURE
    single = (grid_hw == 1)
    needs_mask = (HW % hw_tile) != 0
    n_chunks = max(hw_tile // _LANES, 1)

    def epilogue(pooled, wfc_ref, bsh_ref, wch_ref, bch_ref, wfl_ref, bfl_ref,
                 ch_ref, fl_ref):
        # 1/(H*W) and the eval-mode BN scale are folded into wfc, so the spatial
        # *sum* feeds the fc directly; bn_shift carries beta - running_mean*scale.
        a = jnp.dot(pooled, wfc_ref[...], preferred_element_type=jnp.float32)
        a = jnp.maximum(a + bsh_ref[...], 0.0)                    # fc + BN(eval) + ReLU
        ch = jnp.dot(a, wch_ref[...], preferred_element_type=jnp.float32) + bch_ref[...]
        fl = jnp.dot(a, wfl_ref[...], preferred_element_type=jnp.float32) + bfl_ref[...]
        ch_ref[...] = jax.nn.sigmoid(ch * inv_t)[:, None, :]
        fl_ref[...] = jax.nn.sigmoid(fl * inv_t)[:, None, :]

    def kernel(x_ref, wfc_ref, bsh_ref, wch_ref, bch_ref, wfl_ref, bfl_ref,
               ch_ref, fl_ref, *scratch):
        x = x_ref[...].astype(jnp.float32)            # (b_tile, C, hw_tile)

        if single:
            # Whole row block in one grid step: finish AdaptiveAvgPool2d locally.
            pooled = jnp.sum(x, axis=-1)              # (b_tile, C)
            epilogue(pooled, wfc_ref, bsh_ref, wch_ref, bch_ref, wfl_ref, bfl_ref,
                     ch_ref, fl_ref)
            return

        acc_ref = scratch[0]                          # (b_tile, C, 128) lane-dense partials
        k = pl.program_id(1)

        @pl.when(k == 0)
        def _():
            acc_ref[...] = jnp.zeros_like(acc_ref)

        if needs_mask:
            # Final spatial tile is partial: zero out-of-range lanes in-kernel instead
            # of materialising a padded HBM copy of x.
            lane = lax.broadcasted_iota(jnp.int32, x.shape, 2)
            x = jnp.where(lane < (HW - k * hw_tile), x, 0.0)

        # Lane-dense accumulation: vreg adds over the 128-lane chunks; no per-step
        # cross-lane reduce, no narrow masked stores in the hot loop.
        acc_ref[...] += x.reshape(b_tile, C, n_chunks, _LANES).sum(axis=2)

        @pl.when(k == grid_hw - 1)
        def _():
            pooled = jnp.sum(acc_ref[...], axis=-1)   # single 128-lane reduce, once
            epilogue(pooled, wfc_ref, bsh_ref, wch_ref, bch_ref, wfl_ref, bfl_ref,
                     ch_ref, fl_ref)

    return kernel


def omni_attention(x, params):
    """x: (B, C_in, H, W).  Returns (channel_att, filter_att) as NCHW (B, *, 1, 1)."""
    B, C, H, W = x.shape
    HW = H * W

    wfc_t, bn_scale, bn_shift, wch_t, bch, wfl_t, bfl = params
    A = wfc_t.shape[1]
    O = wfl_t.shape[1]

    # Fold BN(eval) scale and the 1/(H*W) pooling divisor into the fc weight.
    wfc_fold = (wfc_t * bn_scale * (1.0 / HW)).astype(jnp.float32)
    weights = (wfc_fold, bn_shift, wch_t, bch, wfl_t, bfl)

    itemsize = int(jnp.dtype(x.dtype).itemsize)
    cap = _physical_vmem_bytes()
    budget = (cap * 3) // 4                                   # 48 MiB v7x, 96 MiB v5e/v6e
    weight_bytes = 2 * sum(_vmem_tile_bytes(w.shape, 4) for w in weights)

    b_tile, hw_tile, vmem_needed = _plan_tiles(B, C, HW, itemsize, budget, weight_bytes, O)
    grid_b = B // b_tile
    grid_hw = -(-HW // hw_tile)

    # Never request more than physical VMEM (v7x: 64 MiB -> cap at 56 MiB;
    # v5e/v6e: 128 MiB -> cap at 112 MiB).
    cap_limit = cap - max(cap // 8, 8 << 20)
    vmem_limit = int(min(cap_limit, max(vmem_needed, 32 << 20)))

    x_flat = x.reshape(B, C, HW)
    kernel = _make_kernel(HW, hw_tile, grid_hw, b_tile, C)

    scratch_shapes = [] if grid_hw == 1 else [pltpu.VMEM((b_tile, C, _LANES), jnp.float32)]

    def const_spec(shape):
        return pl.BlockSpec(shape, lambda b, k: (0, 0))

    ch, fl = pl.pallas_call(
        kernel,
        out_shape=(jax.ShapeDtypeStruct((B, 1, C), jnp.float32),
                   jax.ShapeDtypeStruct((B, 1, O), jnp.float32)),
        grid_spec=pltpu.PrefetchScalarGridSpec(
            num_scalar_prefetch=0,
            grid=(grid_b, grid_hw),
            in_specs=[
                pl.BlockSpec((b_tile, C, hw_tile), lambda b, k: (b, 0, k)),  # x row blocks
                const_spec((C, A)),   # fc weight^T (BN scale & 1/HW folded in)
                const_spec((1, A)),   # bn shift
                const_spec((A, C)),   # channel_fc weight^T
                const_spec((1, C)),   # channel_fc bias
                const_spec((A, O)),   # filter_fc weight^T
                const_spec((1, O)),   # filter_fc bias
            ],
            out_specs=[
                pl.BlockSpec((b_tile, 1, C), lambda b, k: (b, 0, 0)),
                pl.BlockSpec((b_tile, 1, O), lambda b, k: (b, 0, 0)),
            ],
            scratch_shapes=scratch_shapes,
        ),
        compiler_params=pltpu.CompilerParams(
            dimension_semantics=("parallel", "arbitrary"),
            vmem_limit_bytes=vmem_limit,
        ),
    )(x_flat, *weights)

    return ch.reshape(B, C, 1, 1), fl.reshape(B, O, 1, 1)


def make_params(key, in_planes, out_planes, reduction=0.0625, min_channel=16):
    """Deterministic synthetic init mirroring OmniAttention._initialize_weights."""
    A = max(int(in_planes * reduction), min_channel)
    k_fc, k_ch, k_fl = jax.random.split(key, 3)

    # kaiming_normal_(mode='fan_out', nonlinearity='relu'): std = sqrt(2 / fan_out).
    w_fc = jax.random.normal(k_fc, (A, in_planes), jnp.float32) * math.sqrt(2.0 / A)
    w_ch = jax.random.normal(k_ch, (in_planes, A), jnp.float32) * math.sqrt(2.0 / in_planes)
    w_fl = jax.random.normal(k_fl, (out_planes, A), jnp.float32) * math.sqrt(2.0 / out_planes)
    b_ch = jnp.zeros((in_planes,), jnp.float32)
    b_fl = jnp.zeros((out_planes,), jnp.float32)

    # BatchNorm2d: gamma=1, beta=0, running stats 0/1.
    # TODO(synk): PyTorch default module state is training-mode BN (batch stats);
    # eval-mode running-stats BN is used here.
    gamma = jnp.ones((A,), jnp.float32)
    beta = jnp.zeros((A,), jnp.float32)
    r_mean = jnp.zeros((A,), jnp.float32)
    r_var = jnp.ones((A,), jnp.float32)
    eps = 1e-5
    bn_scale = gamma / jnp.sqrt(r_var + eps)
    bn_shift = beta - r_mean * bn_scale

    return (w_fc.T,                      # (C_in, A)
            bn_scale.reshape(1, A),
            bn_shift.reshape(1, A),
            w_ch.T,                      # (A, C_in)
            b_ch.reshape(1, in_planes),
            w_fl.T,                      # (A, out_planes)
            b_fl.reshape(1, out_planes))


def omni_attention_ref(x, params):
    """Pure-JAX reference for correctness checking."""
    wfc_t, bn_scale, bn_shift, wch_t, bch, wfl_t, bfl = params
    B, C = x.shape[0], x.shape[1]
    O = wfl_t.shape[1]
    pooled = jnp.mean(x, axis=(2, 3))                      # (B, C)
    a = pooled @ wfc_t
    a = jnp.maximum(a * bn_scale + bn_shift, 0.0)
    ch = jax.nn.sigmoid((a @ wch_t + bch) / TEMPERATURE)
    fl = jax.nn.sigmoid((a @ wfl_t + bfl) / TEMPERATURE)
    return ch.reshape(B, C, 1, 1), fl.reshape(B, O, 1, 1)


if __name__ == "__main__":
    key = jax.random.PRNGKey(0)
    k_x, k_p = jax.random.split(key)

    B, C_in, H, W = 2, 4, 16, 16
    out_planes, groups = 8, 1     # in_planes != groups -> filter_fc path is active

    x = jax.random.normal(k_x, (B, C_in, H, W), jnp.float32)
    params = make_params(k_p, C_in, out_planes)

    ch_att, fl_att = omni_attention(x, params)
    jax.block_until_ready((ch_att, fl_att))

    ch_ref, fl_ref = omni_attention_ref(x, params)
    np.testing.assert_allclose(np.asarray(ch_att), np.asarray(ch_ref), rtol=1e-5, atol=1e-5)
    np.testing.assert_allclose(np.asarray(fl_att), np.asarray(fl_ref), rtol=1e-5, atol=1e-5)
    assert ch_att.shape == (B, C_in, 1, 1) and fl_att.shape == (B, out_planes, 1, 1)

    print("KERNEL_OK")
</pallas_src>

<mosaic_0001>
module attributes {stable_mosaic.version = 11 : i64} {
  func.func @kernel(%arg0: i32, %arg1: i32, %arg2: memref<1x4x256xf32, #tpu.memory_space<vmem>>, %arg3: memref<4x16xf32, #tpu.memory_space<vmem>>, %arg4: memref<1x16xf32, #tpu.memory_space<vmem>>, %arg5: memref<16x4xf32, #tpu.memory_space<vmem>>, %arg6: memref<1x4xf32, #tpu.memory_space<vmem>>, %arg7: memref<16x8xf32, #tpu.memory_space<vmem>>, %arg8: memref<1x8xf32, #tpu.memory_space<vmem>>, %arg9: memref<1x1x4xf32, #tpu.memory_space<vmem>>, %arg10: memref<1x1x8xf32, #tpu.memory_space<vmem>>) attributes {dimension_semantics = [#tpu.dimension_semantics<parallel>, #tpu.dimension_semantics<arbitrary>], iteration_bounds = array<i64: 2, 1>, scalar_prefetch = 0 : i64, scratch_operands = 0 : i64, tpu.core_type = #tpu.core_type<tc>, window_params = [{transform_indices = @transform_0, window_bounds = array<i64: 1, 4, 256>}, {pipeline_mode = #tpu.pipeline_mode<synchronous>, transform_indices = @transform_1, window_bounds = array<i64: 4, 16>}, {pipeline_mode = #tpu.pipeline_mode<synchronous>, transform_indices = @transform_2, window_bounds = array<i64: 1, 16>}, {pipeline_mode = #tpu.pipeline_mode<synchronous>, transform_indices = @transform_3, window_bounds = array<i64: 16, 4>}, {pipeline_mode = #tpu.pipeline_mode<synchronous>, transform_indices = @transform_4, window_bounds = array<i64: 1, 4>}, {pipeline_mode = #tpu.pipeline_mode<synchronous>, transform_indices = @transform_5, window_bounds = array<i64: 16, 8>}, {pipeline_mode = #tpu.pipeline_mode<synchronous>, transform_indices = @transform_6, window_bounds = array<i64: 1, 8>}, {transform_indices = @transform_7, window_bounds = array<i64: 1, 1, 4>}, {transform_indices = @transform_8, window_bounds = array<i64: 1, 1, 8>}]} {
    %c0 = arith.constant 0 : index
    %c0_0 = arith.constant 0 : index
    %c0_1 = arith.constant 0 : index
    %0 = vector.load %arg2[%c0, %c0_0, %c0_1] : memref<1x4x256xf32, #tpu.memory_space<vmem>>, vector<1x4x256xf32>
    %cst = arith.constant dense<0.000000e+00> : vector<1x4xf32>
    %1 = vector.multi_reduction <add>, %0, %cst [2] : vector<1x4x256xf32> to vector<1x4xf32>
    %c0_2 = arith.constant 0 : index
    %c0_3 = arith.constant 0 : index
    %2 = vector.load %arg3[%c0_2, %c0_3] : memref<4x16xf32, #tpu.memory_space<vmem>>, vector<4x16xf32>
    %cst_4 = arith.constant dense<0.000000e+00> : vector<1x16xf32>
    %3 = tpu.matmul %1, %2, %cst_4 {dimension_numbers = #tpu.dot_dimension_numbers<[1], [0], [0], [1], [0, 0, 1, 1], [], []>} : vector<1x4xf32>, vector<4x16xf32>, vector<1x16xf32> -> vector<1x16xf32>
    %c0_5 = arith.constant 0 : index
    %c0_6 = arith.constant 0 : index
    %4 = vector.load %arg4[%c0_5, %c0_6] : memref<1x16xf32, #tpu.memory_space<vmem>>, vector<1x16xf32>
    %5 = arith.addf %3, %4 : vector<1x16xf32>
    %cst_7 = arith.constant 0.000000e+00 : f32
    %6 = vector.broadcast %cst_7 : f32 to vector<1x16xf32>
    %7 = arith.maximumf %5, %6 : vector<1x16xf32>
    %c0_8 = arith.constant 0 : index
    %c0_9 = arith.constant 0 : index
    %8 = vector.load %arg5[%c0_8, %c0_9] : memref<16x4xf32, #tpu.memory_space<vmem>>, vector<16x4xf32>
    %cst_10 = arith.constant dense<0.000000e+00> : vector<1x4xf32>
    %9 = tpu.matmul %7, %8, %cst_10 {dimension_numbers = #tpu.dot_dimension_numbers<[1], [0], [0], [1], [0, 0, 1, 1], [], []>} : vector<1x16xf32>, vector<16x4xf32>, vector<1x4xf32> -> vector<1x4xf32>
    %c0_11 = arith.constant 0 : index
    %c0_12 = arith.constant 0 : index
    %10 = vector.load %arg6[%c0_11, %c0_12] : memref<1x4xf32, #tpu.memory_space<vmem>>, vector<1x4xf32>
    %11 = arith.addf %9, %10 : vector<1x4xf32>
    %c0_13 = arith.constant 0 : index
    %c0_14 = arith.constant 0 : index
    %12 = vector.load %arg7[%c0_13, %c0_14] : memref<16x8xf32, #tpu.memory_space<vmem>>, vector<16x8xf32>
    %cst_15 = arith.constant dense<0.000000e+00> : vector<1x8xf32>
    %13 = tpu.matmul %7, %12, %cst_15 {dimension_numbers = #tpu.dot_dimension_numbers<[1], [0], [0], [1], [0, 0, 1, 1], [], []>} : vector<1x16xf32>, vector<16x8xf32>, vector<1x8xf32> -> vector<1x8xf32>
    %c0_16 = arith.constant 0 : index
    %c0_17 = arith.constant 0 : index
    %14 = vector.load %arg8[%c0_16, %c0_17] : memref<1x8xf32, #tpu.memory_space<vmem>>, vector<1x8xf32>
    %15 = arith.addf %13, %14 : vector<1x8xf32>
    %cst_18 = arith.constant 1.000000e+00 : f32
    %16 = vector.broadcast %cst_18 : f32 to vector<1x4xf32>
    %17 = arith.mulf %11, %16 : vector<1x4xf32>
    %18 = arith.negf %17 : vector<1x4xf32>
    %19 = math.exp %18 : vector<1x4xf32>
    %cst_19 = arith.constant 1.000000e+00 : f32
    %20 = vector.broadcast %cst_19 : f32 to vector<1x4xf32>
    %21 = arith.addf %20, %19 : vector<1x4xf32>
    %22 = arith.divf %20, %21 : vector<1x4xf32>
    %23 = vector.shape_cast %22 : vector<1x4xf32> to vector<1x1x4xf32>
    %c0_20 = arith.constant 0 : index
    %c0_21 = arith.constant 0 : index
    %c0_22 = arith.constant 0 : index
    %24 = vector.load %arg9[%c0_20, %c0_21, %c0_22] : memref<1x1x4xf32, #tpu.memory_space<vmem>>, vector<1x1x4xf32>
    tpu.vector_store %arg9[%c0_20, %c0_21, %c0_22], %23 {strides = array<i32>} : memref<1x1x4xf32, #tpu.memory_space<vmem>>, vector<1x1x4xf32>,
    %cst_23 = arith.constant 1.000000e+00 : f32
    %25 = vector.broadcast %cst_23 : f32 to vector<1x8xf32>
    %26 = arith.mulf %15, %25 : vector<1x8xf32>
    %27 = arith.negf %26 : vector<1x8xf32>
    %28 = math.exp %27 : vector<1x8xf32>
    %cst_24 = arith.constant 1.000000e+00 : f32
    %29 = vector.broadcast %cst_24 : f32 to vector<1x8xf32>
    %30 = arith.addf %29, %28 : vector<1x8xf32>
    %31 = arith.divf %29, %30 : vector<1x8xf32>
    %32 = vector.shape_cast %31 : vector<1x8xf32> to vector<1x1x8xf32>
    %c0_25 = arith.constant 0 : index
    %c0_26 = arith.constant 0 : index
    %c0_27 = arith.constant 0 : index
    %33 = vector.load %arg10[%c0_25, %c0_26, %c0_27] : memref<1x1x8xf32, #tpu.memory_space<vmem>>, vector<1x1x8xf32>
    tpu.vector_store %arg10[%c0_25, %c0_26, %c0_27], %32 {strides = array<i32>} : memref<1x1x8xf32, #tpu.memory_space<vmem>>, vector<1x1x8xf32>,
    return
  }
  func.func @transform_0(%arg0: i32, %arg1: i32) -> (i32, i32, i32) {
    %c0_i32 = arith.constant 0 : i32
    %c0_i32_0 = arith.constant 0 : i32
    return %arg0, %c0_i32, %arg1 : i32, i32, i32
  }
  func.func @transform_1(%arg0: i32, %arg1: i32) -> (i32, i32) {
    %c0_i32 = arith.constant 0 : i32
    %c0_i32_0 = arith.constant 0 : i32
    %c0_i32_1 = arith.constant 0 : i32
    return %c0_i32, %c0_i32_0 : i32, i32
  }
  func.func @transform_2(%arg0: i32, %arg1: i32) -> (i32, i32) {
    %c0_i32 = arith.constant 0 : i32
    %c0_i32_0 = arith.constant 0 : i32
    %c0_i32_1 = arith.constant 0 : i32
    return %c0_i32, %c0_i32_0 : i32, i32
  }
  func.func @transform_3(%arg0: i32, %arg1: i32) -> (i32, i32) {
    %c0_i32 = arith.constant 0 : i32
    %c0_i32_0 = arith.constant 0 : i32
    %c0_i32_1 = arith.constant 0 : i32
    return %c0_i32, %c0_i32_0 : i32, i32
  }
  func.func @transform_4(%arg0: i32, %arg1: i32) -> (i32, i32) {
    %c0_i32 = arith.constant 0 : i32
    %c0_i32_0 = arith.constant 0 : i32
    %c0_i32_1 = arith.constant 0 : i32
    return %c0_i32, %c0_i32_0 : i32, i32
  }
  func.func @transform_5(%arg0: i32, %arg1: i32) -> (i32, i32) {
    %c0_i32 = arith.constant 0 : i32
    %c0_i32_0 = arith.constant 0 : i32
    %c0_i32_1 = arith.constant 0 : i32
    return %c0_i32, %c0_i32_0 : i32, i32
  }
  func.func @transform_6(%arg0: i32, %arg1: i32) -> (i32, i32) {
    %c0_i32 = arith.constant 0 : i32
    %c0_i32_0 = arith.constant 0 : i32
    %c0_i32_1 = arith.constant 0 : i32
    return %c0_i32, %c0_i32_0 : i32, i32
  }
  func.func @transform_7(%arg0: i32, %arg1: i32) -> (i32, i32, i32) {
    %c0_i32 = arith.constant 0 : i32
    %c0_i32_0 = arith.constant 0 : i32
    %c0_i32_1 = arith.constant 0 : i32
    return %arg0, %c0_i32, %c0_i32_0 : i32, i32, i32
  }
  func.func @transform_8(%arg0: i32, %arg1: i32) -> (i32, i32, i32) {
    %c0_i32 = arith.constant 0 : i32
    %c0_i32_0 = arith.constant 0 : i32
    %c0_i32_1 = arith.constant 0 : i32
    return %arg0, %c0_i32, %c0_i32_0 : i32, i32, i32
  }
}

</mosaic_0001>

<llo_original>
// kernel: tpu_custom_call.1
$region0: #{tpu_custom_call.1}
  #allocation0 [shape = 'u32[]', space=smem, size = 0x4, offset = 0x4, fixed_abs, tag = 'smem constant byte address 0x4 - core index']
  #allocation1 [shape = 'u32[144,128]{1,0:T(1,128)}', space=vmem, size = 0x12000, scoped, tag = 'internal scratch']
  %s0 = inlined_call_operand.vmem [shape: f32[2,4,256], index: 0, kind: input, shape index: {}]
  %s1 = inlined_call_operand.vmem [shape: f32[4,16], index: 1, kind: input, shape index: {}]
  %s2 = inlined_call_operand.vmem [shape: f32[1,16], index: 2, kind: input, shape index: {}]
  %s3 = inlined_call_operand.vmem [shape: f32[16,4], index: 3, kind: input, shape index: {}]
  %s4 = inlined_call_operand.vmem [shape: f32[1,4], index: 4, kind: input, shape index: {}]
  %s5 = inlined_call_operand.vmem [shape: f32[16,8], index: 5, kind: input, shape index: {}]
  %s6 = inlined_call_operand.vmem [shape: f32[1,8], index: 6, kind: input, shape index: {}]
  %s7 = inlined_call_operand.hbm [shape: f32[2,1,4], index: 7, kind: output, shape index: {0}]
  %s8 = inlined_call_operand.hbm [shape: f32[2,1,8], index: 8, kind: output, shape index: {1}]
  %9 = xla_tuple %s7, %s8
  %s10 = sld [smem:[#allocation0]]
  $region69: #{tpu_custom_call.1} parent=0
    _
  %s12 = ssub.s32 1, %s10
  %s13 = scalar_select 0, %s12, %s10
  $region1: #{tpu_custom_call.1} parent=0
    #allocation2 [shape = 'u8[1024]{0}', space=vmem, size = 0x400, scoped, tag = 'output window, operand 0']
    #allocation3 [shape = 's32[2]{0}', space=sflag, size = 0x8, scoped, tag = 'scoped memory for tpu_custom_call.1']
    #allocation4 [shape = 'u8[1024]{0}', space=vmem, size = 0x400, scoped, tag = 'output window, operand 1']
    #allocation5 [shape = 's32[2]{0}', space=sflag, size = 0x8, scoped, tag = 'scoped memory for tpu_custom_call.1']
    %14 = vsyncpa [#allocation3], 0
    %s15 = scalar_lea.sflag [#allocation3], 1
    %16 = vsyncpa %s15, 0
    %17 = vsyncpa [#allocation5], 0
    %s18 = scalar_lea.sflag [#allocation5], 1
    %19 = vsyncpa %s18, 0
    loop: start=0, step=1, limit=4
    $region2: #{tpu_custom_call.1} parent=1 // loop_pre_header
      _
    $region3: #{tpu_custom_call.1} parent=1 // loop_header
      %s21 = sphi 0, %s25
      %p22 = scmp.ge.s32.totalorder %s21, 4
      %s28 = sphi 0, %s40
      %s29 = sphi 0, %s36
      %s30 = sphi 0, %s28
      %s31 = sphi 0, %s29
      %s32 = sphi 0, %s30
      %s33 = sphi 0, %s31
      %s45 = sphi 0, %s47
      %s48 = sphi 0, %s45
      %s49 = sphi 0, %s48
      %s65 = sphi 0, %s49
      %s69 = sphi 0, %s69
      %s71 = sphi 0, %s69
      %s72 = sphi 0, %s71
      %s86 = sphi 0, %s72
      %s90 = sphi 0, %s90
      %s92 = sphi 0, %s90
      %s93 = sphi 0, %s92
      %s107 = sphi 0, %s93
      %s111 = sphi 0, %s111
      %s113 = sphi 0, %s111
      %s114 = sphi 0, %s113
      %s128 = sphi 0, %s114
      %s132 = sphi 0, %s132
      %s134 = sphi 0, %s132
      %s135 = sphi 0, %s134
      %s149 = sphi 0, %s135
      %s153 = sphi 0, %s153
      %s155 = sphi 0, %s153
      %s156 = sphi 0, %s155
      %s170 = sphi 0, %s156
      %s174 = sphi 0, %s174
      %s176 = sphi 0, %s174
      %s177 = sphi 0, %s176
      %s191 = sphi 0, %s177
      %s197 = sphi 0, %s199
      %s200 = sphi 0, %s197
      %s201 = sphi 0, %s200
      %s217 = sphi 0, %s201
      %s223 = sphi 0, %s225
      %s226 = sphi 0, %s223
      %s227 = sphi 0, %s226
      %s243 = sphi 0, %s227
    $region4: #{tpu_custom_call.1} parent=1 // loop_header_branch
      %24 = sbr.rel (%p22) target = $region8
    $region5: #{tpu_custom_call.1} parent=1 // loop_body
      %s26 = ssub.s32 %s21, 1
      %s27 = ssub.s32 %s21, 2
      %s34 = sadd.s32 1, %s29
      %p35 = scmp.ge.s32.totalorder %s34, 1
      %s36 = scalar_select %p35, 0, %s34
      %s37 = sadd.s32 1, %s28
      %s38 = scalar_select %p35, %s37, %s28
      %p39 = scmp.ge.s32.totalorder %s38, 2
      %s40 = scalar_select %p39, 0, %s38
      %s41 = ssub.s32 %s28, %s40
      %s42 = ssub.s32 %s29, %s36
      %s43 = sor.u32 %s41, %s42
      %p44 = scmp.eq.s32.totalorder %s43, 0
      %s46 = sadd.s32 %s45, 1
      %s47 = scalar_select %p44, %s45, %s46
      %p50 = pneg %p44
      %p51 = scmp.eq.s32.totalorder %s21, 1
      %p52 = por %p50, %p51
      %p53 = scmp.ne.s32.totalorder %s45, %s48
      %p54 = scmp.eq.s32.totalorder %s21, 0
      %p55 = por %p53, %p54
      %p56 = scmp.ne.s32.totalorder %s45, %s48
      %p57 = scmp.eq.s32.totalorder %s26, 1
      %p58 = por %p56, %p57
      %p59 = scmp.ne.s32.totalorder %s48, %s49
      %p60 = scmp.eq.s32.totalorder %s26, 0
      %p61 = por %p59, %p60
      %p62 = scmp.ne.s32.totalorder %s48, %s49
      %p63 = scmp.eq.s32.totalorder %s27, 1
      %p64 = por %p62, %p63
      %p66 = scmp.ne.s32.totalorder %s49, %s65
      %p67 = scmp.eq.s32.totalorder %s27, 0
      %p68 = por %p66, %p67
      %s70 = sadd.s32 %s69, 1
      %p73 = scmp.eq.s32.totalorder %s21, 1
      %p74 = scmp.ne.s32.totalorder %s69, %s71
      %p75 = scmp.eq.s32.totalorder %s21, 0
      %p76 = por %p74, %p75
      %p77 = scmp.ne.s32.totalorder %s69, %s71
      %p78 = scmp.eq.s32.totalorder %s26, 1
      %p79 = por %p77, %p78
      %p80 = scmp.ne.s32.totalorder %s71, %s72
      %p81 = scmp.eq.s32.totalorder %s26, 0
      %p82 = por %p80, %p81
      %p83 = scmp.ne.s32.totalorder %s71, %s72
      %p84 = scmp.eq.s32.totalorder %s27, 1
      %p85 = por %p83, %p84
      %p87 = scmp.ne.s32.totalorder %s72, %s86
      %p88 = scmp.eq.s32.totalorder %s27, 0
      %p89 = por %p87, %p88
      %s91 = sadd.s32 %s90, 1
      %p94 = scmp.eq.s32.totalorder %s21, 1
      %p95 = scmp.ne.s32.totalorder %s90, %s92
      %p96 = scmp.eq.s32.totalorder %s21, 0
      %p97 = por %p95, %p96
      %p98 = scmp.ne.s32.totalorder %s90, %s92
      %p99 = scmp.eq.s32.totalorder %s26, 1
      %p100 = por %p98, %p99
      %p101 = scmp.ne.s32.totalorder %s92, %s93
      %p102 = scmp.eq.s32.totalorder %s26, 0
      %p103 = por %p101, %p102
      %p104 = scmp.ne.s32.totalorder %s92, %s93
      %p105 = scmp.eq.s32.totalorder %s27, 1
      %p106 = por %p104, %p105
      %p108 = scmp.ne.s32.totalorder %s93, %s107
      %p109 = scmp.eq.s32.totalorder %s27, 0
      %p110 = por %p108, %p109
      %s112 = sadd.s32 %s111, 1
      %p115 = scmp.eq.s32.totalorder %s21, 1
      %p116 = scmp.ne.s32.totalorder %s111, %s113
      %p117 = scmp.eq.s32.totalorder %s21, 0
      %p118 = por %p116, %p117
      %p119 = scmp.ne.s32.totalorder %s111, %s113
      %p120 = scmp.eq.s32.totalorder %s26, 1
      %p121 = por %p119, %p120
      %p122 = scmp.ne.s32.totalorder %s113, %s114
      %p123 = scmp.eq.s32.totalorder %s26, 0
      %p124 = por %p122, %p123
      %p125 = scmp.ne.s32.totalorder %s113, %s114
      %p126 = scmp.eq.s32.totalorder %s27, 1
      %p127 = por %p125, %p126
      %p129 = scmp.ne.s32.totalorder %s114, %s128
      %p130 = scmp.eq.s32.totalorder %s27, 0
      %p131 = por %p129, %p130
      %s133 = sadd.s32 %s132, 1
      %p136 = scmp.eq.s32.totalorder %s21, 1
      %p137 = scmp.ne.s32.totalorder %s132, %s134
      %p138 = scmp.eq.s32.totalorder %s21, 0
      %p139 = por %p137, %p138
      %p140 = scmp.ne.s32.totalorder %s132, %s134
      %p141 = scmp.eq.s32.totalorder %s26, 1
      %p142 = por %p140, %p141
      %p143 = scmp.ne.s32.totalorder %s134, %s135
      %p144 = scmp.eq.s32.totalorder %s26, 0
      %p145 = por %p143, %p144
      %p146 = scmp.ne.s32.totalorder %s134, %s135
      %p147 = scmp.eq.s32.totalorder %s27, 1
      %p148 = por %p146, %p147
      %p150 = scmp.ne.s32.totalorder %s135, %s149
      %p151 = scmp.eq.s32.totalorder %s27, 0
      %p152 = por %p150, %p151
      %s154 = sadd.s32 %s153, 1
      %p157 = scmp.eq.s32.totalorder %s21, 1
      %p158 = scmp.ne.s32.totalorder %s153, %s155
      %p159 = scmp.eq.s32.totalorder %s21, 0
      %p160 = por %p158, %p159
      %p161 = scmp.ne.s32.totalorder %s153, %s155
      %p162 = scmp.eq.s32.totalorder %s26, 1
      %p163 = por %p161, %p162
      %p164 = scmp.ne.s32.totalorder %s155, %s156
      %p165 = scmp.eq.s32.totalorder %s26, 0
      %p166 = por %p164, %p165
      %p167 = scmp.ne.s32.totalorder %s155, %s156
      %p168 = scmp.eq.s32.totalorder %s27, 1
      %p169 = por %p167, %p168
      %p171 = scmp.ne.s32.totalorder %s156, %s170
      %p172 = scmp.eq.s32.totalorder %s27, 0
      %p173 = por %p171, %p172
      %s175 = sadd.s32 %s174, 1
      %p178 = scmp.eq.s32.totalorder %s21, 1
      %p179 = scmp.ne.s32.totalorder %s174, %s176
      %p180 = scmp.eq.s32.totalorder %s21, 0
      %p181 = por %p179, %p180
      %p182 = scmp.ne.s32.totalorder %s174, %s176
      %p183 = scmp.eq.s32.totalorder %s26, 1
      %p184 = por %p182, %p183
      %p185 = scmp.ne.s32.totalorder %s176, %s177
      %p186 = scmp.eq.s32.totalorder %s26, 0
      %p187 = por %p185, %p186
      %p188 = scmp.ne.s32.totalorder %s176, %s177
      %p189 = scmp.eq.s32.totalorder %s27, 1
      %p190 = por %p188, %p189
      %p192 = scmp.ne.s32.totalorder %s177, %s191
      %p193 = scmp.eq.s32.totalorder %s27, 0
      %p194 = por %p192, %p193
      %s195 = ssub.s32 %s28, %s40
      %p196 = scmp.eq.s32.totalorder %s195, 0
      %s198 = sadd.s32 %s197, 1
      %s199 = scalar_select %p196, %s197, %s198
      %p202 = pneg %p196
      %p203 = scmp.eq.s32.totalorder %s21, 1
      %p204 = por %p202, %p203
      %p205 = scmp.ne.s32.totalorder %s197, %s200
      %p206 = scmp.eq.s32.totalorder %s21, 0
      %p207 = por %p205, %p206
      %p208 = scmp.ne.s32.totalorder %s197, %s200
      %p209 = scmp.eq.s32.totalorder %s26, 1
      %p210 = por %p208, %p209
      %p211 = scmp.ne.s32.totalorder %s200, %s201
      %p212 = scmp.eq.s32.totalorder %s26, 0
      %p213 = por %p211, %p212
      %p214 = scmp.ne.s32.totalorder %s200, %s201
      %p215 = scmp.eq.s32.totalorder %s27, 1
      %p216 = por %p214, %p215
      %p218 = scmp.ne.s32.totalorder %s201, %s217
      %p219 = scmp.eq.s32.totalorder %s27, 0
      %p220 = por %p218, %p219
      %s221 = ssub.s32 %s28, %s40
      %p222 = scmp.eq.s32.totalorder %s221, 0
      %s224 = sadd.s32 %s223, 1
      %s225 = scalar_select %p222, %s223, %s224
      %p228 = pneg %p222
      %p229 = scmp.eq.s32.totalorder %s21, 1
      %p230 = por %p228, %p229
      %p231 = scmp.ne.s32.totalorder %s223, %s226
      %p232 = scmp.eq.s32.totalorder %s21, 0
      %p233 = por %p231, %p232
      %p234 = scmp.ne.s32.totalorder %s223, %s226
      %p235 = scmp.eq.s32.totalorder %s26, 1
      %p236 = por %p234, %p235
      %p237 = scmp.ne.s32.totalorder %s226, %s227
      %p238 = scmp.eq.s32.totalorder %s26, 0
      %p239 = por %p237, %p238
      %p240 = scmp.ne.s32.totalorder %s226, %s227
      %p241 = scmp.eq.s32.totalorder %s27, 1
      %p242 = por %p240, %p241
      %p244 = scmp.ne.s32.totalorder %s227, %s243
      %p245 = scmp.eq.s32.totalorder %s27, 0
      %p246 = por %p244, %p245
      %p247 = scmp.le.s32.totalorder 1, %s21
      %p248 = scmp.lt.s32.totalorder %s21, 3
      %p249 = pnand %p247, %p248
      %p250 = pneg %p249
      // Predicated region
      $region9: #{tpu_custom_call.1} parent=5 // pred_check
        _
      $region10: #{tpu_custom_call.1} parent=5 // pred_check_branch
        %252 = sbr.rel (%p249) target = $region12
      $region11: #{tpu_custom_call.1} parent=5 // pred_region
        %s253 = ssub.s32 %s21, 1
        // Predicated region
        $region13: #{tpu_custom_call.1} parent=11 // pred_check
          %p254 = pneg %p82
        $region14: #{tpu_custom_call.1} parent=11 // pred_check_branch
          %256 = sbr.rel (%p254) target = $region16
        $region15: #{tpu_custom_call.1} parent=11 // pred_region
          _
        $region16: #{tpu_custom_call.1} parent=11 // pred_fallthru
          _
        // Predicated region
        $region17: #{tpu_custom_call.1} parent=11 // pred_check
          %p257 = pneg %p103
        $region18: #{tpu_custom_call.1} parent=11 // pred_check_branch
          %259 = sbr.rel (%p257) target = $region20
        $region19: #{tpu_custom_call.1} parent=11 // pred_region
          _
        $region20: #{tpu_custom_call.1} parent=11 // pred_fallthru
          _
        // Predicated region
        $region21: #{tpu_custom_call.1} parent=11 // pred_check
          %p260 = pneg %p124
        $region22: #{tpu_custom_call.1} parent=11 // pred_check_branch
          %262 = sbr.rel (%p260) target = $region24
        $region23: #{tpu_custom_call.1} parent=11 // pred_region
          _
        $region24: #{tpu_custom_call.1} parent=11 // pred_fallthru
          _
        // Predicated region
        $region25: #{tpu_custom_call.1} parent=11 // pred_check
          %p263 = pneg %p145
        $region26: #{tpu_custom_call.1} parent=11 // pred_check_branch
          %265 = sbr.rel (%p263) target = $region28
        $region27: #{tpu_custom_call.1} parent=11 // pred_region
          _
        $region28: #{tpu_custom_call.1} parent=11 // pred_fallthru
          _
        // Predicated region
        $region29: #{tpu_custom_call.1} parent=11 // pred_check
          %p266 = pneg %p166
        $region30: #{tpu_custom_call.1} parent=11 // pred_check_branch
          %268 = sbr.rel (%p266) target = $region32
        $region31: #{tpu_custom_call.1} parent=11 // pred_region
          _
        $region32: #{tpu_custom_call.1} parent=11 // pred_fallthru
          _
        // Predicated region
        $region33: #{tpu_custom_call.1} parent=11 // pred_check
          %p269 = pneg %p187
        $region34: #{tpu_custom_call.1} parent=11 // pred_check_branch
          %271 = sbr.rel (%p269) target = $region36
        $region35: #{tpu_custom_call.1} parent=11 // pred_region
          _
        $region36: #{tpu_custom_call.1} parent=11 // pred_fallthru
          _
      $region12: #{tpu_custom_call.1} parent=5 // pred_fallthru
        _
      %p272 = scmp.lt.s32.totalorder %s21, 2
      // Predicated region
      $region37: #{tpu_custom_call.1} parent=5 // pred_check
        %p273 = pneg %p272
      $region38: #{tpu_custom_call.1} parent=5 // pred_check_branch
        %275 = sbr.rel (%p273) target = $region40
      $region39: #{tpu_custom_call.1} parent=5 // pred_region
        // Predicated region
        $region41: #{tpu_custom_call.1} parent=39 // pred_check
          %p276 = pneg %p55
        $region42: #{tpu_custom_call.1} parent=39 // pred_check_branch
          %278 = sbr.rel (%p276) target = $region44
        $region43: #{tpu_custom_call.1} parent=39 // pred_region
          %s279 = smul.u32 2, %s29
          %p280 = scmp.lt.s32.totalorder %s28, 1
          %s281 = scalar_select %p280, %s28, 1
          %p282 = scmp.lt.s32.totalorder %s279, 1
          %s283 = scalar_select %p282, %s279, 1
          %s284 = smul.addr %s281, 2
          %s285 = sadd.s32 %s283, %s284
          %s286 = smul.addr %s285, 4
          %s287 = scalar_lea.vmem %s0, %s286
          %s288 = smul.u32 2, %s29
        $region44: #{tpu_custom_call.1} parent=39 // pred_fallthru
          _
      $region40: #{tpu_custom_call.1} parent=5 // pred_fallthru
        _
      %p289 = scmp.le.s32.totalorder 1, %s21
      %p290 = scmp.lt.s32.totalorder %s21, 3
      %p291 = pnand %p289, %p290
      %p292 = pneg %p291
      // Predicated region
      $region45: #{tpu_custom_call.1} parent=5 // pred_check
        _
      $region46: #{tpu_custom_call.1} parent=5 // pred_check_branch
        %294 = sbr.rel (%p291) target = $region48
      $region47: #{tpu_custom_call.1} parent=5 // pred_region
        %s295 = ssub.s32 %s21, 1
        %s296 = smul.u32 2, %s31
        %p297 = scmp.lt.s32.totalorder %s30, 1
        %s298 = scalar_select %p297, %s30, 1
        %p299 = scmp.lt.s32.totalorder %s296, 1
        %s300 = scalar_select %p299, %s296, 1
        %s301 = smul.addr %s298, 2
        %s302 = sadd.s32 %s300, %s301
        %s303 = smul.addr %s302, 4
        %s304 = scalar_lea.vmem %s0, %s303
        %p305 = pneg %p61
        %p306 = pneg %p58
        %p307 = pneg %p82
        %p308 = pneg %p79
        %p309 = pneg %p103
        %p310 = pneg %p100
        %p311 = pneg %p124
        %p312 = pneg %p121
        %p313 = pneg %p145
        %p314 = pneg %p142
        %p315 = pneg %p166
        %p316 = pneg %p163
        %p317 = pneg %p187
        %p318 = pneg %p184
        %p319 = pneg %p213
        %p320 = pneg %p210
        %s321 = sand.u32 %s200, 1
        %s322 = scalar_lea.sflag [#allocation3], %s321
        %s323 = sand.u32 %s200, 1
        %s324 = scalar_lea.vmem [#allocation2], %s323
        %p325 = pneg %p239
        %p326 = pneg %p236
        %s327 = sand.u32 %s226, 1
        %s328 = scalar_lea.sflag [#allocation5], %s327
        %s329 = sand.u32 %s226, 1
        %s330 = scalar_lea.vmem [#allocation4], %s329
        %s331 = smul.u32 2, %s31
        %p332 = scmp.lt.s32.totalorder %s30, 1
        %s333 = scalar_select %p332, %s30, 1
        %p334 = scmp.lt.s32.totalorder %s331, 1
        %s335 = scalar_select %p334, %s331, 1
        %s336 = smul.addr %s333, 2
        %s337 = sadd.s32 %s335, %s336
        %s338 = smul.addr %s337, 4
        %s339 = scalar_lea.vmem %s0, %s338
        %s340 = smul.u32 2, %s31
        %v341 = vld [vmem:[%s339] sm:$0xff]
        %v343 = vcombine.high %v341, %v341
        %vm345 = vcmask 1043456
        %v346 = vsel %vm345, %v341, 0.0
        %v347 = vsel %vm345, %v343, 0.0
        %v348 = vadd.f32 %v346, %v347
        %349 = vadd.xlane.f32.xlu0 %v348
        %v350 = vpop.xlane.xlu0 %349
        %v351 = vld [vmem:[%s1] sm:$0xf]
        %v352 = vld [vmem:[%s2] sm:$0x1]
        %v354 = vlaneseq
        %v355 = vand.u32 %v354, 127
        %v356 = vlaneseq
        %v357 = vshrl.u32 %v356, 7
        %v358 = vsub.s32 %v355, %v357
        %v359 = vrot.slane %v350, %v358
        %vm360 = vcmask 31744
        %v361 = vsel %vm360, %v359, 0
        %v364 = vsel %vm345, %v351, 0
        %366 = vmatprep.subr.mxu0 0.0
        %367 = vmatpush1.msra.mxu0 0.0
        %368 = vmatprep.subr.mxu0 0.0
        %369 = vmatpush1.msra.mxu0 0.0
        %370 = vmatprep.subr.mxu0 0.0
        %371 = vmatpush1.msra.mxu0 0.0
        %372 = vmatprep.subr.mxu0 0.0
        %373 = vmatpush1.msra.mxu0 0.0
        %374 = vmatprep.subr.mxu0 0.0
        %375 = vmatpush1.msra.mxu0 0.0
        %376 = vmatprep.subr.mxu0 0.0
        %377 = vmatpush1.msra.mxu0 0.0
        %378 = vmatprep.subr.mxu0 0.0
        %379 = vmatpush1.msra.mxu0 0.0
        %380 = vmatprep.subr.mxu0 0.0
        %381 = vmatpush1.msra.mxu0 0.0
        %382 = vmatprep.subr.mxu0 0.0
        %383 = vmatpush1.msra.mxu0 0.0
        %384 = vmatprep.subr.mxu0 0.0
        %385 = vmatpush1.msra.mxu0 0.0
        %386 = vmatprep.subr.mxu0 0.0
        %387 = vmatpush1.msra.mxu0 0.0
        %388 = vmatprep.subr.mxu0 0.0
        %389 = vmatpush1.msra.mxu0 0.0
        %390 = vmatprep.subr.mxu0 0.0
        %391 = vmatpush1.msra.mxu0 0.0
        %392 = vmatprep.subr.mxu0 0.0
        %393 = vmatpush1.msra.mxu0 0.0
        %394 = vmatprep.subr.mxu0 0.0
        %395 = vmatpush1.msra.mxu0 0.0
        %396 = vmatprep.subr.mxu0 0.0
        %397 = vmatpush1.msra.mxu0 %v364
        %398 = vmatprep.subr.mxu0 0.0
        %399 = vmatpush2.msra.mxu0 0.0
        %400 = vmatprep.subr.mxu0 0.0
        %401 = vmatpush2.msra.mxu0 0.0
        %402 = vmatprep.subr.mxu0 0.0
        %403 = vmatpush2.msra.mxu0 0.0
        %404 = vmatprep.subr.mxu0 0.0
        %405 = vmatpush2.msra.mxu0 0.0
        %406 = vmatprep.subr.mxu0 0.0
        %407 = vmatpush2.msra.mxu0 0.0
        %408 = vmatprep.subr.mxu0 0.0
        %409 = vmatpush2.msra.mxu0 0.0
        %410 = vmatprep.subr.mxu0 0.0
        %411 = vmatpush2.msra.mxu0 0.0
        %412 = vmatprep.subr.mxu0 0.0
        %413 = vmatpush2.msra.mxu0 0.0
        %414 = vmatprep.subr.mxu0 0.0
        %415 = vmatpush2.msra.mxu0 0.0
        %416 = vmatprep.subr.mxu0 0.0
        %417 = vmatpush2.msra.mxu0 0.0
        %418 = vmatprep.subr.mxu0 0.0
        %419 = vmatpush2.msra.mxu0 0.0
        %420 = vmatprep.subr.mxu0 0.0
        %421 = vmatpush2.msra.mxu0 0.0
        %422 = vmatprep.subr.mxu0 0.0
        %423 = vmatpush2.msra.mxu0 0.0
        %424 = vmatprep.subr.mxu0 0.0
        %425 = vmatpush2.msra.mxu0 0.0
        %426 = vmatprep.subr.mxu0 0.0
        %427 = vmatpush2.msra.mxu0 0.0
        %428 = vmatprep.subr.mxu0 0.0
        %429 = vmatpush2.msra.mxu0 0.0
        %430 = vmatprep.mubr.f32.mxu0 0.0
        %431 = vmatmul.mubr.f32.gmra.mxu0 %v361
        %v432 = vpop.f32.mrf.mxu0
        %v433 = vadd.f32 %v352, %v432
        %v434 = vpop.f32.mrf.mxu0
        %435 = vdwg.mxu0
        %v436 = vmax.f32 %v433, 0.0
        %v437 = vld [vmem:[%s3] sm:$0xff]
        %v438 = vld [vmem:[%s3 + $0x8] sm:$0xff]
        %v439 = vld [vmem:[%s4] sm:$0x1]
        %vm440 = vcmask 130048
        %v442 = vsel %vm440, %v436, 0
        %444 = vmatprep.subr.mxu0 0.0
        %445 = vmatpush1.msra.mxu0 0.0
        %446 = vmatprep.subr.mxu0 0.0
        %447 = vmatpush1.msra.mxu0 0.0
        %448 = vmatprep.subr.mxu0 0.0
        %449 = vmatpush1.msra.mxu0 0.0
        %450 = vmatprep.subr.mxu0 0.0
        %451 = vmatpush1.msra.mxu0 0.0
        %452 = vmatprep.subr.mxu0 0.0
        %453 = vmatpush1.msra.mxu0 0.0
        %454 = vmatprep.subr.mxu0 0.0
        %455 = vmatpush1.msra.mxu0 0.0
        %456 = vmatprep.subr.mxu0 0.0
        %457 = vmatpush1.msra.mxu0 0.0
        %458 = vmatprep.subr.mxu0 0.0
        %459 = vmatpush1.msra.mxu0 0.0
        %460 = vmatprep.subr.mxu0 0.0
        %461 = vmatpush1.msra.mxu0 0.0
        %462 = vmatprep.subr.mxu0 0.0
        %463 = vmatpush1.msra.mxu0 0.0
        %464 = vmatprep.subr.mxu0 0.0
        %465 = vmatpush1.msra.mxu0 0.0
        %466 = vmatprep.subr.mxu0 0.0
        %467 = vmatpush1.msra.mxu0 0.0
        %468 = vmatprep.subr.mxu0 0.0
        %469 = vmatpush1.msra.mxu0 0.0
        %470 = vmatprep.subr.mxu0 0.0
        %471 = vmatpush1.msra.mxu0 0.0
        %472 = vmatprep.subr.mxu0 0.0
        %473 = vmatpush1.msra.mxu0 %v438
        %474 = vmatprep.subr.mxu0 0.0
        %475 = vmatpush1.msra.mxu0 %v437
        %476 = vmatprep.subr.mxu0 0.0
        %477 = vmatpush2.msra.mxu0 0.0
        %478 = vmatprep.subr.mxu0 0.0
        %479 = vmatpush2.msra.mxu0 0.0
        %480 = vmatprep.subr.mxu0 0.0
        %481 = vmatpush2.msra.mxu0 0.0
        %482 = vmatprep.subr.mxu0 0.0
        %483 = vmatpush2.msra.mxu0 0.0
        %484 = vmatprep.subr.mxu0 0.0
        %485 = vmatpush2.msra.mxu0 0.0
        %486 = vmatprep.subr.mxu0 0.0
        %487 = vmatpush2.msra.mxu0 0.0
        %488 = vmatprep.subr.mxu0 0.0
        %489 = vmatpush2.msra.mxu0 0.0
        %490 = vmatprep.subr.mxu0 0.0
        %491 = vmatpush2.msra.mxu0 0.0
        %492 = vmatprep.subr.mxu0 0.0
        %493 = vmatpush2.msra.mxu0 0.0
        %494 = vmatprep.subr.mxu0 0.0
        %495 = vmatpush2.msra.mxu0 0.0
        %496 = vmatprep.subr.mxu0 0.0
        %497 = vmatpush2.msra.mxu0 0.0
        %498 = vmatprep.subr.mxu0 0.0
        %499 = vmatpush2.msra.mxu0 0.0
        %500 = vmatprep.subr.mxu0 0.0
        %501 = vmatpush2.msra.mxu0 0.0
        %502 = vmatprep.subr.mxu0 0.0
        %503 = vmatpush2.msra.mxu0 0.0
        %504 = vmatprep.subr.mxu0 0.0
        %505 = vmatpush2.msra.mxu0 0.0
        %506 = vmatprep.subr.mxu0 0.0
        %507 = vmatpush2.msra.mxu0 0.0
        %508 = vmatprep.mubr.f32.mxu0 0.0
        %509 = vmatmul.mubr.f32.gmra.mxu0 %v442
        %v510 = vpop.f32.mrf.mxu0
        %v511 = vadd.f32 %v439, %v510
        %v512 = vpop.f32.mrf.mxu0
        %513 = vdwg.mxu0
        %v514 = vld [vmem:[%s5] sm:$0xff]
        %v515 = vld [vmem:[%s5 + $0x8] sm:$0xff]
        %v516 = vld [vmem:[%s6] sm:$0x1]
        %517 = vmatprep.subr.mxu0 0.0
        %518 = vmatpush1.msra.mxu0 0.0
        %519 = vmatprep.subr.mxu0 0.0
        %520 = vmatpush1.msra.mxu0 0.0
        %521 = vmatprep.subr.mxu0 0.0
        %522 = vmatpush1.msra.mxu0 0.0
        %523 = vmatprep.subr.mxu0 0.0
        %524 = vmatpush1.msra.mxu0 0.0
        %525 = vmatprep.subr.mxu0 0.0
        %526 = vmatpush1.msra.mxu0 0.0
        %527 = vmatprep.subr.mxu0 0.0
        %528 = vmatpush1.msra.mxu0 0.0
        %529 = vmatprep.subr.mxu0 0.0
        %530 = vmatpush1.msra.mxu0 0.0
        %531 = vmatprep.subr.mxu0 0.0
        %532 = vmatpush1.msra.mxu0 0.0
        %533 = vmatprep.subr.mxu0 0.0
        %534 = vmatpush1.msra.mxu0 0.0
        %535 = vmatprep.subr.mxu0 0.0
        %536 = vmatpush1.msra.mxu0 0.0
        %537 = vmatprep.subr.mxu0 0.0
        %538 = vmatpush1.msra.mxu0 0.0
        %539 = vmatprep.subr.mxu0 0.0
        %540 = vmatpush1.msra.mxu0 0.0
        %541 = vmatprep.subr.mxu0 0.0
        %542 = vmatpush1.msra.mxu0 0.0
        %543 = vmatprep.subr.mxu0 0.0
        %544 = vmatpush1.msra.mxu0 0.0
        %545 = vmatprep.subr.mxu0 0.0
        %546 = vmatpush1.msra.mxu0 %v515
        %547 = vmatprep.subr.mxu0 0.0
        %548 = vmatpush1.msra.mxu0 %v514
        %549 = vmatprep.subr.mxu0 0.0
        %550 = vmatpush2.msra.mxu0 0.0
        %551 = vmatprep.subr.mxu0 0.0
        %552 = vmatpush2.msra.mxu0 0.0
        %553 = vmatprep.subr.mxu0 0.0
        %554 = vmatpush2.msra.mxu0 0.0
        %555 = vmatprep.subr.mxu0 0.0
        %556 = vmatpush2.msra.mxu0 0.0
        %557 = vmatprep.subr.mxu0 0.0
        %558 = vmatpush2.msra.mxu0 0.0
        %559 = vmatprep.subr.mxu0 0.0
        %560 = vmatpush2.msra.mxu0 0.0
        %561 = vmatprep.subr.mxu0 0.0
        %562 = vmatpush2.msra.mxu0 0.0
        %563 = vmatprep.subr.mxu0 0.0
        %564 = vmatpush2.msra.mxu0 0.0
        %565 = vmatprep.subr.mxu0 0.0
        %566 = vmatpush2.msra.mxu0 0.0
        %567 = vmatprep.subr.mxu0 0.0
        %568 = vmatpush2.msra.mxu0 0.0
        %569 = vmatprep.subr.mxu0 0.0
        %570 = vmatpush2.msra.mxu0 0.0
        %571 = vmatprep.subr.mxu0 0.0
        %572 = vmatpush2.msra.mxu0 0.0
        %573 = vmatprep.subr.mxu0 0.0
        %574 = vmatpush2.msra.mxu0 0.0
        %575 = vmatprep.subr.mxu0 0.0
        %576 = vmatpush2.msra.mxu0 0.0
        %577 = vmatprep.subr.mxu0 0.0
        %578 = vmatpush2.msra.mxu0 0.0
        %579 = vmatprep.subr.mxu0 0.0
        %580 = vmatpush2.msra.mxu0 0.0
        %581 = vmatprep.mubr.f32.mxu0 0.0
        %582 = vmatmul.mubr.f32.gmra.mxu0 %v442
        %v583 = vpop.f32.mrf.mxu0
        %v584 = vadd.f32 %v516, %v583
        %v585 = vpop.f32.mrf.mxu0
        %586 = vdwg.mxu0
        %v587 = vxor.u32 %v511, 2147483648
        %v588 = vmul.f32 %v587, 1.442695
        %v589 = vpow.pop %v588
        %v590 = vadd.f32 %v589, 1.0
        %v591 = vrcp.pop %v590
        %v592 = vmul.f32 1.0, %v591
        %vm593 = vcmask 24576
        %594 = vst.msk [vmem:[%s324] sm:$0x1] %vm593, %v592
        %v595 = vxor.u32 %v584, 2147483648
        %v596 = vmul.f32 %v595, 1.442695
        %v597 = vpow.pop %v596
        %v598 = vadd.f32 %v597, 1.0
        %v599 = vrcp.pop %v598
        %v600 = vmul.f32 1.0, %v599
        %vm601 = vcmask 57344
        %602 = vst.msk [vmem:[%s330] sm:$0x1] %vm601, %v600
        %s603 = sand.u32 %s200, 1
        %s604 = scalar_lea.sflag [#allocation3], %s603
        %s605 = sand.u32 %s200, 1
        %s606 = scalar_lea.vmem [#allocation2], %s605
        %s607 = sand.u32 %s226, 1
        %s608 = scalar_lea.sflag [#allocation5], %s607
        %s609 = sand.u32 %s226, 1
        %s610 = scalar_lea.vmem [#allocation4], %s609
        // Predicated region
        $region49: #{tpu_custom_call.1} parent=47 // pred_check
          %p611 = pneg %p210
        $region50: #{tpu_custom_call.1} parent=47 // pred_check_branch
          %613 = sbr.rel (%p611) target = $region52
        $region51: #{tpu_custom_call.1} parent=47 // pred_region
          %s615 = ssub.s32 16, 16
          %616 = vsyncadd %s604, %s615
          %s617 = smul.addr %s30, 16
          %s618 = scalar_lea.hbm %s7, %s617
          %s620 = sshll.u32 %s606, 4
          %s621 = int_to_ptr.vmem [resolvable:$true] %s620
          %623 = dma.vmem_to_hbm [thread:$0]  %s621, 16, %s618, %s604
        $region52: #{tpu_custom_call.1} parent=47 // pred_fallthru
          _
        // Predicated region
        $region53: #{tpu_custom_call.1} parent=47 // pred_check
          %p624 = pneg %p236
        $region54: #{tpu_custom_call.1} parent=47 // pred_check_branch
          %626 = sbr.rel (%p624) target = $region56
        $region55: #{tpu_custom_call.1} parent=47 // pred_region
          %s628 = ssub.s32 16, 16
          %629 = vsyncadd %s608, %s628
          %s630 = smul.addr %s30, 16
          %s631 = scalar_lea.hbm %s8, %s630
          %s633 = sshll.u32 %s610, 4
          %s634 = int_to_ptr.vmem [resolvable:$true] %s633
          %636 = dma.vmem_to_hbm [thread:$0]  %s634, 16, %s631, %s608
        $region56: #{tpu_custom_call.1} parent=47 // pred_fallthru
          _
      $region48: #{tpu_custom_call.1} parent=5 // pred_fallthru
        _
      %p637 = scmp.le.s32.totalorder 2, %s21
      // Predicated region
      $region57: #{tpu_custom_call.1} parent=5 // pred_check
        %p638 = pneg %p637
      $region58: #{tpu_custom_call.1} parent=5 // pred_check_branch
        %640 = sbr.rel (%p638) target = $region60
      $region59: #{tpu_custom_call.1} parent=5 // pred_region
        %s641 = ssub.s32 %s21, 2
        // Predicated region
        $region61: #{tpu_custom_call.1} parent=59 // pred_check
          %p642 = pneg %p216
        $region62: #{tpu_custom_call.1} parent=59 // pred_check_branch
          %644 = sbr.rel (%p642) target = $region64
        $region63: #{tpu_custom_call.1} parent=59 // pred_region
          %s645 = sand.u32 %s201, 1
          %s646 = scalar_lea.sflag [#allocation3], %s645
          %s647 = sand.u32 %s201, 1
          %s648 = scalar_lea.vmem [#allocation2], %s647
          %649 = dma.done %s646, 16
        $region64: #{tpu_custom_call.1} parent=59 // pred_fallthru
          _
        // Predicated region
        $region65: #{tpu_custom_call.1} parent=59 // pred_check
          %p650 = pneg %p242
        $region66: #{tpu_custom_call.1} parent=59 // pred_check_branch
          %652 = sbr.rel (%p650) target = $region68
        $region67: #{tpu_custom_call.1} parent=59 // pred_region
          %s653 = sand.u32 %s227, 1
          %s654 = scalar_lea.sflag [#allocation5], %s653
          %s655 = sand.u32 %s227, 1
          %s656 = scalar_lea.vmem [#allocation4], %s655
          %657 = dma.done %s654, 16
        $region68: #{tpu_custom_call.1} parent=59 // pred_fallthru
          _
      $region60: #{tpu_custom_call.1} parent=5 // pred_fallthru
        _
    $region6: #{tpu_custom_call.1} parent=1 // loop_footer
      %s25 = sadd.s32 1, %s21
    $region7: #{tpu_custom_call.1} parent=1 // loop_footer_branch
      %20 = sbr.rel target = $region3
    $region8: #{tpu_custom_call.1} parent=1 // loop_exit
      _
    %658 = vsyncpa [#allocation3], 1
    %s659 = scalar_lea.sflag [#allocation3], 1
    %660 = vsyncpa %s659, 1
    %661 = vsyncpa [#allocation5], 1
    %s662 = scalar_lea.sflag [#allocation5], 1
    %663 = vsyncpa %s662, 1

</llo_original>
